<compile_context>
chip_gen: v5e
topology: v5e:2x2
jax: 0.10.0
libtpu: 0.0.40
codegen_flags: <defaults>
</compile_context>

<pallas_src>
import functools

import jax
import jax.numpy as jnp
from jax.experimental import pallas as pl
from jax.experimental.pallas import tpu as pltpu


def _intra_inter_kernel(margin, use_wi, use_we, need_mask, total_rows, *refs):
    refs = list(refs)
    p_ref = refs.pop(0)
    ni_ref = refs.pop(0)
    ne_ref = refs.pop(0)
    wi_ref = refs.pop(0) if use_wi else None
    we_ref = refs.pop(0) if use_we else None
    intra_ref, inter_ref, pi_ref, pe_ref = refs

    p = p_ref[...].astype(jnp.float32)
    intra = jnp.maximum(margin + (p - ni_ref[...].astype(jnp.float32)), 0.0)
    inter = jnp.maximum(margin + (p - ne_ref[...].astype(jnp.float32)), 0.0)
    if use_wi:
        intra = intra * wi_ref[...].astype(jnp.float32)
    if use_we:
        inter = inter * we_ref[...].astype(jnp.float32)

    # Elementwise outputs; out-of-bounds rows of a boundary block (if any)
    # are dropped by Pallas automatically.
    intra_ref[...] = intra.astype(intra_ref.dtype)
    inter_ref[...] = inter.astype(inter_ref.dtype)

    if need_mask:
        rows = intra.shape[0]
        i = pl.program_id(0)
        row_ids = jax.lax.broadcasted_iota(jnp.int32, (rows, 1), 0)
        valid = (i * rows + row_ids) < total_rows
        intra_s = jnp.where(valid, intra, 0.0)
        inter_s = jnp.where(valid, inter, 0.0)
    else:
        intra_s = intra
        inter_s = inter

    # Per-block partial sums (1, D); final tiny reduction happens in JAX.
    pi_ref[...] = jnp.sum(intra_s, axis=0, keepdims=True)[None]
    pe_ref[...] = jnp.sum(inter_s, axis=0, keepdims=True)[None]


def intra_inter_margin_loss(p, n_intra, n_inter,
                            iw_intra=None, iw_inter=None,
                            *, w_intra=0.5, w_inter=0.2, margin=0.1,
                            tile_rows=1024):
    """Pallas implementation of IntraInterMarginLoss.forward."""
    assert p.shape == n_intra.shape == n_inter.shape
    if iw_intra is not None:
        assert iw_intra.shape == p.shape
    if iw_inter is not None:
        assert iw_inter.shape == p.shape

    orig_shape = p.shape
    if p.ndim >= 2:
        D = orig_shape[-1]
        M = 1
        for s in orig_shape[:-1]:
            M *= s
    else:
        D = orig_shape[0]
        M = 1

    use_wi = iw_intra is not None
    use_we = iw_inter is not None

    def flat(x):
        return x.reshape(M, D)

    inputs = [flat(p), flat(n_intra), flat(n_inter)]
    if use_wi:
        inputs.append(flat(iw_intra))
    if use_we:
        inputs.append(flat(iw_inter))

    # Tile sizing: as many rows as fit a conservative VMEM budget (v5e default
    # scoped VMEM is 16 MiB).  Double-buffered streams = inputs + 2 big
    # elementwise outputs (the (1,1,D) partial-sum outputs are negligible).
    n_streams = len(inputs) + 2
    vmem_budget = 12 * 1024 * 1024
    bytes_per_row = max(1, D) * 4 * n_streams * 2          # f32, 2 buffers
    cap = max(8, min(int(tile_rows), vmem_budget // bytes_per_row) // 8 * 8)

    if M <= cap:
        rows = M            # block dim == full array dim: no masking needed
        need_mask = False
    else:
        rows = cap          # multiple of 8; boundary block masked in-kernel
        need_mask = (M % rows) != 0
    num_blocks = (M + rows - 1) // rows

    tile_spec = pl.BlockSpec((rows, D), lambda i: (i, 0))
    part_spec = pl.BlockSpec((1, 1, D), lambda i: (i, 0, 0))

    kernel = functools.partial(_intra_inter_kernel, float(margin),
                               use_wi, use_we, need_mask, M)

    intra_flat, inter_flat, part_intra, part_inter = pl.pallas_call(
        kernel,
        out_shape=(
            jax.ShapeDtypeStruct((M, D), p.dtype),
            jax.ShapeDtypeStruct((M, D), p.dtype),
            jax.ShapeDtypeStruct((num_blocks, 1, D), jnp.float32),
            jax.ShapeDtypeStruct((num_blocks, 1, D), jnp.float32),
        ),
        grid_spec=pltpu.PrefetchScalarGridSpec(
            num_scalar_prefetch=0,
            grid=(num_blocks,),
            in_specs=[tile_spec] * len(inputs),
            out_specs=[tile_spec, tile_spec, part_spec, part_spec],
        ),
        compiler_params=pltpu.CompilerParams(
            dimension_semantics=("parallel",)),
    )(*inputs)

    n_elems = jnp.float32(M * D)
    loss = (w_intra * jnp.sum(part_intra) / n_elems
            + w_inter * jnp.sum(part_inter) / n_elems)

    intra_loss = intra_flat.reshape(orig_shape)
    inter_loss = inter_flat.reshape(orig_shape)
    return loss, intra_loss, inter_loss


def _reference(p, n_intra, n_inter, iw_intra=None, iw_inter=None,
               w_intra=0.5, w_inter=0.2, margin=0.1):
    intra = jnp.maximum(margin + (p - n_intra), 0.0)
    inter = jnp.maximum(margin + (p - n_inter), 0.0)
    if iw_intra is not None:
        intra = intra * iw_intra
    if iw_inter is not None:
        inter = inter * iw_inter
    loss = w_intra * intra.mean() + w_inter * inter.mean()
    return loss, intra, inter


if __name__ == "__main__":
    key = jax.random.PRNGKey(0)
    k1, k2, k3, k4, k5 = jax.random.split(key, 5)

    def make(shape):
        return (jax.random.normal(k1, shape, dtype=jnp.float32),
                jax.random.normal(k2, shape, dtype=jnp.float32),
                jax.random.normal(k3, shape, dtype=jnp.float32),
                jax.random.uniform(k4, shape, dtype=jnp.float32),
                jax.random.uniform(k5, shape, dtype=jnp.float32))

    checks = []

    # Case 1: with instance weights (5-input kernel), single lane-dense block.
    p, ni, ne, wi, we = make((2, 10, 128))
    checks.append((intra_inter_margin_loss(p, ni, ne, wi, we),
                   _reference(p, ni, ne, wi, we)))

    # Case 2: common no-weights path (specialized 3-input kernel).
    checks.append((intra_inter_margin_loss(p, ni, ne),
                   _reference(p, ni, ne)))

    # Case 3: multi-block grid with a masked (non-divisible) boundary block.
    p3, ni3, ne3, wi3, we3 = make((3, 37, 128))
    checks.append((intra_inter_margin_loss(p3, ni3, ne3, wi3, we3,
                                           tile_rows=16),
                   _reference(p3, ni3, ne3, wi3, we3)))

    # Case 4: narrow last dim (not a multiple of 128), no weights.
    p4, ni4, ne4, _, _ = make((4, 40))
    checks.append((intra_inter_margin_loss(p4, ni4, ne4),
                   _reference(p4, ni4, ne4)))

    jax.block_until_ready(checks)

    for (loss, intra, inter), (rl, ri, re) in checks:
        assert jnp.allclose(loss, rl, atol=1e-5, rtol=1e-5)
        assert jnp.allclose(intra, ri, atol=1e-5, rtol=1e-5)
        assert jnp.allclose(inter, re, atol=1e-5, rtol=1e-5)

    print("KERNEL_OK")
</pallas_src>

<mosaic_0001>
module attributes {stable_mosaic.version = 11 : i64} {
  func.func @_intra_inter_kernel(%arg0: i32, %arg1: memref<20x128xf32, #tpu.memory_space<vmem>>, %arg2: memref<20x128xf32, #tpu.memory_space<vmem>>, %arg3: memref<20x128xf32, #tpu.memory_space<vmem>>, %arg4: memref<20x128xf32, #tpu.memory_space<vmem>>, %arg5: memref<20x128xf32, #tpu.memory_space<vmem>>, %arg6: memref<20x128xf32, #tpu.memory_space<vmem>>, %arg7: memref<20x128xf32, #tpu.memory_space<vmem>>, %arg8: memref<1x1x128xf32, #tpu.memory_space<vmem>>, %arg9: memref<1x1x128xf32, #tpu.memory_space<vmem>>) attributes {dimension_semantics = [#tpu.dimension_semantics<parallel>], iteration_bounds = array<i64: 1>, scalar_prefetch = 0 : i64, scratch_operands = 0 : i64, tpu.core_type = #tpu.core_type<tc>, window_params = [{transform_indices = @transform_0, window_bounds = array<i64: 20, 128>}, {transform_indices = @transform_1, window_bounds = array<i64: 20, 128>}, {transform_indices = @transform_2, window_bounds = array<i64: 20, 128>}, {transform_indices = @transform_3, window_bounds = array<i64: 20, 128>}, {transform_indices = @transform_4, window_bounds = array<i64: 20, 128>}, {transform_indices = @transform_5, window_bounds = array<i64: 20, 128>}, {transform_indices = @transform_6, window_bounds = array<i64: 20, 128>}, {transform_indices = @transform_7, window_bounds = array<i64: 1, 1, 128>}, {transform_indices = @transform_8, window_bounds = array<i64: 1, 1, 128>}]} {
    %c0 = arith.constant 0 : index
    %c0_0 = arith.constant 0 : index
    %0 = vector.load %arg1[%c0, %c0_0] : memref<20x128xf32, #tpu.memory_space<vmem>>, vector<20x128xf32>
    %c0_1 = arith.constant 0 : index
    %c0_2 = arith.constant 0 : index
    %1 = vector.load %arg2[%c0_1, %c0_2] : memref<20x128xf32, #tpu.memory_space<vmem>>, vector<20x128xf32>
    %2 = arith.subf %0, %1 : vector<20x128xf32>
    %cst = arith.constant 1.000000e-01 : f32
    %3 = vector.broadcast %cst : f32 to vector<20x128xf32>
    %4 = arith.addf %3, %2 : vector<20x128xf32>
    %cst_3 = arith.constant 0.000000e+00 : f32
    %5 = vector.broadcast %cst_3 : f32 to vector<20x128xf32>
    %6 = arith.maximumf %4, %5 : vector<20x128xf32>
    %c0_4 = arith.constant 0 : index
    %c0_5 = arith.constant 0 : index
    %7 = vector.load %arg3[%c0_4, %c0_5] : memref<20x128xf32, #tpu.memory_space<vmem>>, vector<20x128xf32>
    %8 = arith.subf %0, %7 : vector<20x128xf32>
    %cst_6 = arith.constant 1.000000e-01 : f32
    %9 = vector.broadcast %cst_6 : f32 to vector<20x128xf32>
    %10 = arith.addf %9, %8 : vector<20x128xf32>
    %cst_7 = arith.constant 0.000000e+00 : f32
    %11 = vector.broadcast %cst_7 : f32 to vector<20x128xf32>
    %12 = arith.maximumf %10, %11 : vector<20x128xf32>
    %c0_8 = arith.constant 0 : index
    %c0_9 = arith.constant 0 : index
    %13 = vector.load %arg4[%c0_8, %c0_9] : memref<20x128xf32, #tpu.memory_space<vmem>>, vector<20x128xf32>
    %14 = arith.mulf %6, %13 : vector<20x128xf32>
    %c0_10 = arith.constant 0 : index
    %c0_11 = arith.constant 0 : index
    %15 = vector.load %arg5[%c0_10, %c0_11] : memref<20x128xf32, #tpu.memory_space<vmem>>, vector<20x128xf32>
    %16 = arith.mulf %12, %15 : vector<20x128xf32>
    %c0_12 = arith.constant 0 : index
    %c0_13 = arith.constant 0 : index
    %17 = vector.load %arg6[%c0_12, %c0_13] : memref<20x128xf32, #tpu.memory_space<vmem>>, vector<20x128xf32>
    tpu.vector_store %arg6[%c0_12, %c0_13], %14 {strides = array<i32>} : memref<20x128xf32, #tpu.memory_space<vmem>>, vector<20x128xf32>,
    %c0_14 = arith.constant 0 : index
    %c0_15 = arith.constant 0 : index
    %18 = vector.load %arg7[%c0_14, %c0_15] : memref<20x128xf32, #tpu.memory_space<vmem>>, vector<20x128xf32>
    tpu.vector_store %arg7[%c0_14, %c0_15], %16 {strides = array<i32>} : memref<20x128xf32, #tpu.memory_space<vmem>>, vector<20x128xf32>,
    %cst_16 = arith.constant dense<0.000000e+00> : vector<128xf32>
    %19 = vector.multi_reduction <add>, %14, %cst_16 [0] : vector<20x128xf32> to vector<128xf32>
    %20 = vector.shape_cast %19 : vector<128xf32> to vector<1x128xf32>
    %21 = vector.shape_cast %20 : vector<1x128xf32> to vector<1x1x128xf32>
    %c0_17 = arith.constant 0 : index
    %c0_18 = arith.constant 0 : index
    %c0_19 = arith.constant 0 : index
    %22 = vector.load %arg8[%c0_17, %c0_18, %c0_19] : memref<1x1x128xf32, #tpu.memory_space<vmem>>, vector<1x1x128xf32>
    tpu.vector_store %arg8[%c0_17, %c0_18, %c0_19], %21 {strides = array<i32>} : memref<1x1x128xf32, #tpu.memory_space<vmem>>, vector<1x1x128xf32>,
    %cst_20 = arith.constant dense<0.000000e+00> : vector<128xf32>
    %23 = vector.multi_reduction <add>, %16, %cst_20 [0] : vector<20x128xf32> to vector<128xf32>
    %24 = vector.shape_cast %23 : vector<128xf32> to vector<1x128xf32>
    %25 = vector.shape_cast %24 : vector<1x128xf32> to vector<1x1x128xf32>
    %c0_21 = arith.constant 0 : index
    %c0_22 = arith.constant 0 : index
    %c0_23 = arith.constant 0 : index
    %26 = vector.load %arg9[%c0_21, %c0_22, %c0_23] : memref<1x1x128xf32, #tpu.memory_space<vmem>>, vector<1x1x128xf32>
    tpu.vector_store %arg9[%c0_21, %c0_22, %c0_23], %25 {strides = array<i32>} : memref<1x1x128xf32, #tpu.memory_space<vmem>>, vector<1x1x128xf32>,
    return
  }
  func.func @transform_0(%arg0: i32) -> (i32, i32) {
    %c0_i32 = arith.constant 0 : i32
    %c0_i32_0 = arith.constant 0 : i32
    return %arg0, %c0_i32 : i32, i32
  }
  func.func @transform_1(%arg0: i32) -> (i32, i32) {
    %c0_i32 = arith.constant 0 : i32
    %c0_i32_0 = arith.constant 0 : i32
    return %arg0, %c0_i32 : i32, i32
  }
  func.func @transform_2(%arg0: i32) -> (i32, i32) {
    %c0_i32 = arith.constant 0 : i32
    %c0_i32_0 = arith.constant 0 : i32
    return %arg0, %c0_i32 : i32, i32
  }
  func.func @transform_3(%arg0: i32) -> (i32, i32) {
    %c0_i32 = arith.constant 0 : i32
    %c0_i32_0 = arith.constant 0 : i32
    return %arg0, %c0_i32 : i32, i32
  }
  func.func @transform_4(%arg0: i32) -> (i32, i32) {
    %c0_i32 = arith.constant 0 : i32
    %c0_i32_0 = arith.constant 0 : i32
    return %arg0, %c0_i32 : i32, i32
  }
  func.func @transform_5(%arg0: i32) -> (i32, i32) {
    %c0_i32 = arith.constant 0 : i32
    %c0_i32_0 = arith.constant 0 : i32
    return %arg0, %c0_i32 : i32, i32
  }
  func.func @transform_6(%arg0: i32) -> (i32, i32) {
    %c0_i32 = arith.constant 0 : i32
    %c0_i32_0 = arith.constant 0 : i32
    return %arg0, %c0_i32 : i32, i32
  }
  func.func @transform_7(%arg0: i32) -> (i32, i32, i32) {
    %c0_i32 = arith.constant 0 : i32
    %c0_i32_0 = arith.constant 0 : i32
    %c0_i32_1 = arith.constant 0 : i32
    return %arg0, %c0_i32, %c0_i32_0 : i32, i32, i32
  }
  func.func @transform_8(%arg0: i32) -> (i32, i32, i32) {
    %c0_i32 = arith.constant 0 : i32
    %c0_i32_0 = arith.constant 0 : i32
    %c0_i32_1 = arith.constant 0 : i32
    return %arg0, %c0_i32, %c0_i32_0 : i32, i32, i32
  }
}

</mosaic_0001>

<llo_original>
// kernel: tpu_custom_call.1
$region0: #{tpu_custom_call.1}
  #allocation0 [shape = 'u32[]', space=smem, size = 0x4, offset = 0x4, fixed_abs, tag = 'smem constant byte address 0x4 - core index']
  #allocation1 [shape = 'u32[72,128]{1,0:T(1,128)}', space=vmem, size = 0x9000, scoped, tag = 'internal scratch']
  %s0 = inlined_call_operand.hbm [shape: f32[20,128], index: 0, kind: input, shape index: {}]
  %s1 = inlined_call_operand.hbm [shape: f32[20,128], index: 1, kind: input, shape index: {}]
  %s2 = inlined_call_operand.hbm [shape: f32[20,128], index: 2, kind: input, shape index: {}]
  %s3 = inlined_call_operand.hbm [shape: f32[20,128], index: 3, kind: input, shape index: {}]
  %s4 = inlined_call_operand.hbm [shape: f32[20,128], index: 4, kind: input, shape index: {}]
  %s5 = inlined_call_operand.hbm [shape: f32[20,128], index: 5, kind: output, shape index: {0}]
  %s6 = inlined_call_operand.hbm [shape: f32[20,128], index: 6, kind: output, shape index: {1}]
  %s7 = inlined_call_operand.hbm [shape: f32[1,1,128], index: 7, kind: output, shape index: {2}]
  %s8 = inlined_call_operand.hbm [shape: f32[1,1,128], index: 8, kind: output, shape index: {3}]
  %9 = xla_tuple %s5, %s6, %s7, %s8
  %s10 = sld [smem:[#allocation0]]
  $region74: #{tpu_custom_call.1} parent=0
    _
  %s12 = ssub.s32 1, %s10
  %s13 = scalar_select 0, %s12, %s10
  $region1: #{tpu_custom_call.1} parent=0
    #allocation2 [shape = 'u8[12288]{0}', space=vmem, size = 0x3000, scoped, tag = 'input window, operand 0, single buffered']
    #allocation3 [shape = 's32[1]{0}', space=sflag, size = 0x4, scoped, tag = 'scoped memory for tpu_custom_call.1']
    #allocation4 [shape = 's32[1]{0}', space=sflag, size = 0x4, scoped, tag = 'scoped memory for tpu_custom_call.1']
    #allocation5 [shape = 'u8[12288]{0}', space=vmem, size = 0x3000, scoped, tag = 'input window, operand 1, single buffered']
    #allocation6 [shape = 's32[1]{0}', space=sflag, size = 0x4, scoped, tag = 'scoped memory for tpu_custom_call.1']
    #allocation7 [shape = 'u8[12288]{0}', space=vmem, size = 0x3000, scoped, tag = 'input window, operand 2, single buffered']
    #allocation8 [shape = 'u8[12288]{0}', space=vmem, size = 0x3000, scoped, tag = 'input window, operand 3, single buffered']
    #allocation9 [shape = 's32[1]{0}', space=sflag, size = 0x4, scoped, tag = 'scoped memory for tpu_custom_call.1']
    #allocation10 [shape = 'u8[12288]{0}', space=vmem, size = 0x3000, scoped, tag = 'input window, operand 4, single buffered']
    #allocation11 [shape = 'u8[12288]{0}', space=vmem, size = 0x3000, scoped, tag = 'output window, operand 0, single buffered']
    #allocation12 [shape = 'u8[12288]{0}', space=vmem, size = 0x3000, scoped, tag = 'output window, operand 1, single buffered']
    #allocation13 [shape = 's32[1]{0}', space=sflag, size = 0x4, scoped, tag = 'scoped memory for tpu_custom_call.1']
    #allocation14 [shape = 'u8[512]{0}', space=vmem, size = 0x400, scoped, tag = 'output window, operand 2, single buffered']
    #allocation15 [shape = 'u8[512]{0}', space=vmem, size = 0x400, scoped, tag = 'output window, operand 3, single buffered']
    #allocation16 [shape = 's32[1]{0}', space=sflag, size = 0x4, scoped, tag = 'scoped memory for tpu_custom_call.1']
    %14 = vsyncpa [#allocation3], 0
    %15 = vsyncpa [#allocation6], 0
    %16 = vsyncpa [#allocation9], 0
    %17 = vsyncpa [#allocation4], 0
    %18 = vsyncpa [#allocation13], 0
    %19 = vsyncpa [#allocation16], 0
    // Predicated region
    $region2: #{tpu_custom_call.1} parent=1 // pred_check
      _
    $region3: #{tpu_custom_call.1} parent=1 // pred_check_branch
      %21 = sbr.rel (0) target = $region5
    $region4: #{tpu_custom_call.1} parent=1 // pred_region
      %23 = vsyncadd [#allocation3], 0
      %s24 = sshll.u32 %s0, 4
      %s25 = int_to_ptr.hbm [resolvable:$true] %s24
      %s26 = sshll.u32 [#allocation2], 4
      %s27 = int_to_ptr.vmem [resolvable:$true] %s26
      %32 = dma.hbm_to_vmem [thread:$0]  %s25, 384, %s27, [#allocation3], 128, 128, 8
    $region5: #{tpu_custom_call.1} parent=1 // pred_fallthru
      _
    // Predicated region
    $region6: #{tpu_custom_call.1} parent=1 // pred_check
      _
    $region7: #{tpu_custom_call.1} parent=1 // pred_check_branch
      %34 = sbr.rel (0) target = $region9
    $region8: #{tpu_custom_call.1} parent=1 // pred_region
      %36 = vsyncadd [#allocation6], 0
      %s37 = sshll.u32 %s1, 4
      %s38 = int_to_ptr.hbm [resolvable:$true] %s37
      %s39 = sshll.u32 [#allocation5], 4
      %s40 = int_to_ptr.vmem [resolvable:$true] %s39
      %45 = dma.hbm_to_vmem [thread:$0]  %s38, 384, %s40, [#allocation6], 128, 128, 8
    $region9: #{tpu_custom_call.1} parent=1 // pred_fallthru
      _
    // Predicated region
    $region10: #{tpu_custom_call.1} parent=1 // pred_check
      _
    $region11: #{tpu_custom_call.1} parent=1 // pred_check_branch
      %47 = sbr.rel (0) target = $region13
    $region12: #{tpu_custom_call.1} parent=1 // pred_region
      %49 = vsyncadd [#allocation6], 0
      %s50 = sshll.u32 %s2, 4
      %s51 = int_to_ptr.hbm [resolvable:$true] %s50
      %s52 = sshll.u32 [#allocation7], 4
      %s53 = int_to_ptr.vmem [resolvable:$true] %s52
      %58 = dma.hbm_to_vmem [thread:$0]  %s51, 384, %s53, [#allocation6], 128, 128, 8
    $region13: #{tpu_custom_call.1} parent=1 // pred_fallthru
      _
    // Predicated region
    $region14: #{tpu_custom_call.1} parent=1 // pred_check
      _
    $region15: #{tpu_custom_call.1} parent=1 // pred_check_branch
      %60 = sbr.rel (0) target = $region17
    $region16: #{tpu_custom_call.1} parent=1 // pred_region
      %62 = vsyncadd [#allocation9], 0
      %s63 = sshll.u32 %s3, 4
      %s64 = int_to_ptr.hbm [resolvable:$true] %s63
      %s65 = sshll.u32 [#allocation8], 4
      %s66 = int_to_ptr.vmem [resolvable:$true] %s65
      %71 = dma.hbm_to_vmem [thread:$0]  %s64, 384, %s66, [#allocation9], 128, 128, 8
    $region17: #{tpu_custom_call.1} parent=1 // pred_fallthru
      _
    // Predicated region
    $region18: #{tpu_custom_call.1} parent=1 // pred_check
      _
    $region19: #{tpu_custom_call.1} parent=1 // pred_check_branch
      %73 = sbr.rel (0) target = $region21
    $region20: #{tpu_custom_call.1} parent=1 // pred_region
      %75 = vsyncadd [#allocation9], 0
      %s76 = sshll.u32 %s4, 4
      %s77 = int_to_ptr.hbm [resolvable:$true] %s76
      %s78 = sshll.u32 [#allocation10], 4
      %s79 = int_to_ptr.vmem [resolvable:$true] %s78
      %84 = dma.hbm_to_vmem [thread:$0]  %s77, 384, %s79, [#allocation9], 128, 128, 8
    $region21: #{tpu_custom_call.1} parent=1 // pred_fallthru
      _
    // Predicated region
    $region22: #{tpu_custom_call.1} parent=1 // pred_check
      _
    $region23: #{tpu_custom_call.1} parent=1 // pred_check_branch
      %86 = sbr.rel (0) target = $region25
    $region24: #{tpu_custom_call.1} parent=1 // pred_region
      %88 = dma.done [#allocation3], 384
    $region25: #{tpu_custom_call.1} parent=1 // pred_fallthru
      _
    // Predicated region
    $region26: #{tpu_custom_call.1} parent=1 // pred_check
      _
    $region27: #{tpu_custom_call.1} parent=1 // pred_check_branch
      %90 = sbr.rel (0) target = $region29
    $region28: #{tpu_custom_call.1} parent=1 // pred_region
      %92 = dma.done [#allocation6], 384
    $region29: #{tpu_custom_call.1} parent=1 // pred_fallthru
      _
    // Predicated region
    $region30: #{tpu_custom_call.1} parent=1 // pred_check
      _
    $region31: #{tpu_custom_call.1} parent=1 // pred_check_branch
      %94 = sbr.rel (0) target = $region33
    $region32: #{tpu_custom_call.1} parent=1 // pred_region
      %96 = dma.done [#allocation6], 384
    $region33: #{tpu_custom_call.1} parent=1 // pred_fallthru
      _
    // Predicated region
    $region34: #{tpu_custom_call.1} parent=1 // pred_check
      _
    $region35: #{tpu_custom_call.1} parent=1 // pred_check_branch
      %98 = sbr.rel (0) target = $region37
    $region36: #{tpu_custom_call.1} parent=1 // pred_region
      %100 = dma.done [#allocation9], 384
    $region37: #{tpu_custom_call.1} parent=1 // pred_fallthru
      _
    // Predicated region
    $region38: #{tpu_custom_call.1} parent=1 // pred_check
      _
    $region39: #{tpu_custom_call.1} parent=1 // pred_check_branch
      %102 = sbr.rel (0) target = $region41
    $region40: #{tpu_custom_call.1} parent=1 // pred_region
      %104 = dma.done [#allocation9], 384
    $region41: #{tpu_custom_call.1} parent=1 // pred_fallthru
      _
    %v105 = vld [vmem:[#allocation2] sm:$0xff]
    %v106 = vld [vmem:[#allocation2 + $0x8] sm:$0xff]
    %v107 = vld [vmem:[#allocation2 + $0x10] sm:$0xf]
    %v108 = vld [vmem:[#allocation5] sm:$0xff]
    %v109 = vld [vmem:[#allocation5 + $0x8] sm:$0xff]
    %v110 = vld [vmem:[#allocation5 + $0x10] sm:$0xf]
    %v111 = vsub.f32 %v105, %v108
    %v112 = vsub.f32 %v106, %v109
    %v113 = vsub.f32 %v107, %v110
    %v114 = vadd.f32 %v111, 0.1
    %v115 = vadd.f32 %v112, 0.1
    %v116 = vadd.f32 %v113, 0.1
    %v117 = vmax.f32 %v114, 0.0
    %v118 = vmax.f32 %v115, 0.0
    %v119 = vmax.f32 %v116, 0.0
    %v120 = vld [vmem:[#allocation7] sm:$0xff]
    %v121 = vld [vmem:[#allocation7 + $0x8] sm:$0xff]
    %v122 = vld [vmem:[#allocation7 + $0x10] sm:$0xf]
    %v123 = vsub.f32 %v105, %v120
    %v124 = vsub.f32 %v106, %v121
    %v125 = vsub.f32 %v107, %v122
    %v126 = vadd.f32 %v123, 0.1
    %v127 = vadd.f32 %v124, 0.1
    %v128 = vadd.f32 %v125, 0.1
    %v129 = vmax.f32 %v126, 0.0
    %v130 = vmax.f32 %v127, 0.0
    %v131 = vmax.f32 %v128, 0.0
    %v132 = vld [vmem:[#allocation8] sm:$0xff]
    %v133 = vld [vmem:[#allocation8 + $0x8] sm:$0xff]
    %v134 = vld [vmem:[#allocation8 + $0x10] sm:$0xf]
    %v135 = vmul.f32 %v117, %v132
    %v136 = vmul.f32 %v118, %v133
    %v137 = vmul.f32 %v119, %v134
    %v138 = vld [vmem:[#allocation10] sm:$0xff]
    %v139 = vld [vmem:[#allocation10 + $0x8] sm:$0xff]
    %v140 = vld [vmem:[#allocation10 + $0x10] sm:$0xf]
    %v141 = vmul.f32 %v129, %v138
    %v142 = vmul.f32 %v130, %v139
    %v143 = vmul.f32 %v131, %v140
    %144 = vst [vmem:[#allocation11] sm:$0xff] %v135
    %145 = vst [vmem:[#allocation11 + $0x8] sm:$0xff] %v136
    %146 = vst [vmem:[#allocation11 + $0x10] sm:$0xf] %v137
    %147 = vst [vmem:[#allocation12] sm:$0xff] %v141
    %148 = vst [vmem:[#allocation12 + $0x8] sm:$0xff] %v142
    %149 = vst [vmem:[#allocation12 + $0x10] sm:$0xf] %v143
    %v150 = vadd.f32 %v135, %v136
    %vm151 = vcmask 1043456
    %v152 = vsel %vm151, %v137, 0.0
    %v153 = vadd.f32 %v150, %v152
    %v154 = vrot.slane %v153, 4
    %v155 = vadd.f32 %v153, %v154
    %v156 = vrot.slane %v155, 2
    %v157 = vadd.f32 %v155, %v156
    %v158 = vrot.slane %v157, 1
    %v159 = vadd.f32 %v157, %v158
    %160 = vst [vmem:[#allocation14] sm:$0x1] %v159
    %v161 = vadd.f32 %v141, %v142
    %v162 = vsel %vm151, %v143, 0.0
    %v163 = vadd.f32 %v161, %v162
    %v164 = vrot.slane %v163, 4
    %v165 = vadd.f32 %v163, %v164
    %v166 = vrot.slane %v165, 2
    %v167 = vadd.f32 %v165, %v166
    %v168 = vrot.slane %v167, 1
    %v169 = vadd.f32 %v167, %v168
    %170 = vst [vmem:[#allocation15] sm:$0x1] %v169
    // Predicated region
    $region42: #{tpu_custom_call.1} parent=1 // pred_check
      _
    $region43: #{tpu_custom_call.1} parent=1 // pred_check_branch
      %172 = sbr.rel (0) target = $region45
    $region44: #{tpu_custom_call.1} parent=1 // pred_region
      %174 = vsyncadd [#allocation4], 0
      %s175 = sshll.u32 [#allocation11], 4
      %s176 = int_to_ptr.vmem [resolvable:$true] %s175
      %s177 = sshll.u32 %s5, 4
      %s178 = int_to_ptr.hbm [resolvable:$true] %s177
      %183 = dma.vmem_to_hbm [thread:$0]  %s176, 384, %s178, [#allocation4], 128, 128, 8
    $region45: #{tpu_custom_call.1} parent=1 // pred_fallthru
      _
    // Predicated region
    $region46: #{tpu_custom_call.1} parent=1 // pred_check
      _
    $region47: #{tpu_custom_call.1} parent=1 // pred_check_branch
      %185 = sbr.rel (0) target = $region49
    $region48: #{tpu_custom_call.1} parent=1 // pred_region
      %187 = vsyncadd [#allocation13], 0
      %s188 = sshll.u32 [#allocation12], 4
      %s189 = int_to_ptr.vmem [resolvable:$true] %s188
      %s190 = sshll.u32 %s6, 4
      %s191 = int_to_ptr.hbm [resolvable:$true] %s190
      %196 = dma.vmem_to_hbm [thread:$0]  %s189, 384, %s191, [#allocation13], 128, 128, 8
    $region49: #{tpu_custom_call.1} parent=1 // pred_fallthru
      _
    // Predicated region
    $region50: #{tpu_custom_call.1} parent=1 // pred_check
      _
    $region51: #{tpu_custom_call.1} parent=1 // pred_check_branch
      %198 = sbr.rel (0) target = $region53
    $region52: #{tpu_custom_call.1} parent=1 // pred_region
      %200 = vsyncadd [#allocation13], 0
      %s202 = sshll.u32 [#allocation14], 4
      %s203 = int_to_ptr.vmem [resolvable:$true] %s202
      %s204 = sshll.u32 %s7, 4
      %s205 = int_to_ptr.hbm [resolvable:$true] %s204
      %207 = dma.vmem_to_hbm [thread:$0]  %s203, 16, %s205, [#allocation13]
    $region53: #{tpu_custom_call.1} parent=1 // pred_fallthru
      _
    // Predicated region
    $region54: #{tpu_custom_call.1} parent=1 // pred_check
      _
    $region55: #{tpu_custom_call.1} parent=1 // pred_check_branch
      %209 = sbr.rel (0) target = $region57
    $region56: #{tpu_custom_call.1} parent=1 // pred_region
      %211 = vsyncadd [#allocation16], 0
      %s213 = sshll.u32 [#allocation15], 4
      %s214 = int_to_ptr.vmem [resolvable:$true] %s213
      %s215 = sshll.u32 %s8, 4
      %s216 = int_to_ptr.hbm [resolvable:$true] %s215
      %218 = dma.vmem_to_hbm [thread:$0]  %s214, 16, %s216, [#allocation16]
    $region57: #{tpu_custom_call.1} parent=1 // pred_fallthru
      _
    // Predicated region
    $region58: #{tpu_custom_call.1} parent=1 // pred_check
      _
    $region59: #{tpu_custom_call.1} parent=1 // pred_check_branch
      %220 = sbr.rel (0) target = $region61
    $region60: #{tpu_custom_call.1} parent=1 // pred_region
      %222 = dma.done [#allocation4], 384
    $region61: #{tpu_custom_call.1} parent=1 // pred_fallthru
      _
    // Predicated region
    $region62: #{tpu_custom_call.1} parent=1 // pred_check
      _
    $region63: #{tpu_custom_call.1} parent=1 // pred_check_branch
      %224 = sbr.rel (0) target = $region65
    $region64: #{tpu_custom_call.1} parent=1 // pred_region
      %226 = dma.done [#allocation13], 384
    $region65: #{tpu_custom_call.1} parent=1 // pred_fallthru
      _
    // Predicated region
    $region66: #{tpu_custom_call.1} parent=1 // pred_check
      _
    $region67: #{tpu_custom_call.1} parent=1 // pred_check_branch
      %228 = sbr.rel (0) target = $region69
    $region68: #{tpu_custom_call.1} parent=1 // pred_region
      %230 = dma.done [#allocation13], 16
    $region69: #{tpu_custom_call.1} parent=1 // pred_fallthru
      _
    // Predicated region
    $region70: #{tpu_custom_call.1} parent=1 // pred_check
      _
    $region71: #{tpu_custom_call.1} parent=1 // pred_check_branch
      %232 = sbr.rel (0) target = $region73
    $region72: #{tpu_custom_call.1} parent=1 // pred_region
      %234 = dma.done [#allocation16], 16
    $region73: #{tpu_custom_call.1} parent=1 // pred_fallthru
      _
    %235 = vsyncpa [#allocation3], 1
    %236 = vsyncpa [#allocation6], 1
    %237 = vsyncpa [#allocation9], 1
    %238 = vsyncpa [#allocation4], 1
    %239 = vsyncpa [#allocation13], 1
    %240 = vsyncpa [#allocation16], 1

</llo_original>
